<compile_context>
chip_gen: v5e
topology: v5e:2x2
jax: 0.10.0
libtpu: 0.0.40
codegen_flags: <defaults>
</compile_context>

<pallas_src>
import functools

import jax
import jax.numpy as jnp
from jax.experimental import pallas as pl
from jax.experimental.pallas import tpu as pltpu

EPS = 1e-5
_MAX_TILE_HW = 8192            # 64 ch * 8192 cols * 4 B = 2 MiB per x buffer
_VMEM_LIMIT = 32 * 1024 * 1024  # ample (peak usage < 6 MiB), safe on v5e/v6e/v7x


def _plan_hw(hw: int):
    """Return (tile, padded_hw): tile is a multiple of 128 (or the full dim)."""
    if hw <= _MAX_TILE_HW:
        return hw, hw                       # single full-width block (always legal)
    t = _MAX_TILE_HW
    while t >= 128:
        if hw % t == 0:
            return t, hw                    # exact multiple-of-128 divisor
        t -= 128
    # No usable divisor: pad HW up to a multiple of the max tile (zeros are
    # harmless for the stats and the padded output columns are sliced off).
    t = _MAX_TILE_HW
    return t, ((hw + t - 1) // t) * t


def _fused_kernel(x_ref, gamma_ref, beta_ref, w_ref, o_ref, a_ref, b_ref, *, inv_m):
    # x_ref: (C, tHW) f32; gamma/beta: (C, 1); w_ref: (C_out, C);
    # o_ref: (C_out, tHW); a_ref/b_ref: (C, 1) VMEM scratch shared across the
    # whole (sequential, "arbitrary") grid: sums during phase 0, folded BN
    # scale/shift after the phase-0 finalize, consumed by phase 1.
    phase = pl.program_id(0)
    n = pl.program_id(1)
    h = pl.program_id(2)

    @pl.when(phase == 0)
    def _stats():
        @pl.when(jnp.logical_and(n == 0, h == 0))
        def _():
            a_ref[...] = jnp.zeros_like(a_ref)
            b_ref[...] = jnp.zeros_like(b_ref)

        x = x_ref[...]
        # f32 XLU lane reductions: exact enough for BN stats, no MXU bf16
        # truncation, no concat / ones temporaries.
        a_ref[...] += jnp.sum(x, axis=-1, keepdims=True)        # running sum
        b_ref[...] += jnp.sum(x * x, axis=-1, keepdims=True)    # running sumsq

        last = jnp.logical_and(n == pl.num_programs(1) - 1,
                               h == pl.num_programs(2) - 1)

        @pl.when(last)
        def _finalize():
            mean = a_ref[...] * inv_m
            ex2 = b_ref[...] * inv_m
            # Single-pass E[x^2]-E[x]^2 (clamped); f32 sums keep this accurate
            # for realistic activation statistics.
            var = jnp.maximum(ex2 - mean * mean, 0.0)
            a = gamma_ref[...] * jax.lax.rsqrt(var + EPS)        # folded BN scale
            a_ref[...] = a
            b_ref[...] = beta_ref[...] - mean * a                # folded BN shift

    @pl.when(phase == 1)
    def _apply():
        # Folded BN affine + ReLU: 2 VPU ops + max per element.
        xn = jnp.maximum(x_ref[...] * a_ref[...] + b_ref[...], 0.0)
        # 1x1 conv (bias=False) == channel-mixing matmul on the MXU.
        o_ref[...] = jnp.dot(w_ref[...], xn, preferred_element_type=jnp.float32)


def embedding_forward(x_nchw, gamma, beta, conv_w):
    """x_nchw: (N, C, H, W) f32; gamma/beta: (C,); conv_w: (C_out, C, 1, 1)."""
    N, C, H, W = x_nchw.shape
    C_out = conv_w.shape[0]
    HW = H * W
    M = N * HW                                   # true element count for the mean
    tHW, HW_p = _plan_hw(HW)
    n_hw = HW_p // tHW

    x_v = x_nchw.reshape(N, C, HW)               # free reshape, no transpose
    if HW_p != HW:
        x_v = jnp.pad(x_v, ((0, 0), (0, 0), (0, HW_p - HW)))
    gamma_c = gamma.reshape(C, 1)
    beta_c = beta.reshape(C, 1)
    w2d = conv_w.reshape(C_out, C)

    out_v = pl.pallas_call(
        functools.partial(_fused_kernel, inv_m=float(1.0 / M)),
        out_shape=jax.ShapeDtypeStruct((N, C_out, HW_p), jnp.float32),
        grid=(2, N, n_hw),                       # (phase, image, hw-tile)
        in_specs=[
            pl.BlockSpec((None, C, tHW), lambda p, n, h: (n, 0, h)),
            pl.BlockSpec((C, 1), lambda p, n, h: (0, 0)),
            pl.BlockSpec((C, 1), lambda p, n, h: (0, 0)),
            pl.BlockSpec((C_out, C), lambda p, n, h: (0, 0)),
        ],
        # Phase 0 pins output block (0,0,0) (never written -> never flushed);
        # phase 1 visits every (n, h) block and fully writes it, lane-dense.
        out_specs=pl.BlockSpec((None, C_out, tHW),
                               lambda p, n, h: (n * p, 0, h * p)),
        scratch_shapes=[pltpu.VMEM((C, 1), jnp.float32),   # sum   -> folded a
                        pltpu.VMEM((C, 1), jnp.float32)],  # sumsq -> folded b
        compiler_params=pltpu.CompilerParams(
            # Stats are a global reduction consumed by phase 1, so every axis
            # must stay sequential ("arbitrary") on a single TensorCore.
            dimension_semantics=("arbitrary", "arbitrary", "arbitrary"),
            vmem_limit_bytes=_VMEM_LIMIT),
    )(x_v, gamma_c, beta_c, w2d)

    if HW_p != HW:
        out_v = out_v[:, :, :HW]
    # TODO(synk): PyTorch training-mode BatchNorm also updates running_mean /
    # running_var buffers; that state update is omitted (forward output unaffected).
    return out_v.reshape(N, C_out, H, W)         # free reshape, no transpose


def _reference(x_nchw, gamma, beta, conv_w):
    # Pure-JAX reference replicating PyTorch training-mode BN + ReLU + 1x1 conv.
    mean = jnp.mean(x_nchw, axis=(0, 2, 3), keepdims=True)
    var = jnp.var(x_nchw, axis=(0, 2, 3), keepdims=True)  # biased
    xn = (x_nchw - mean) * jax.lax.rsqrt(var + EPS)
    xn = xn * gamma.reshape(1, -1, 1, 1) + beta.reshape(1, -1, 1, 1)
    xn = jnp.maximum(xn, 0.0)
    w2d = conv_w.reshape(conv_w.shape[0], conv_w.shape[1])  # (C_out, C)
    return jnp.einsum("nchw,oc->nohw", xn, w2d)


if __name__ == "__main__":
    key = jax.random.PRNGKey(0)
    k_x, k_g, k_b, k_w = jax.random.split(key, 4)

    N, C, H, W = 2, 64, 16, 16   # feature_dim = 64
    C_out = 4                    # embedding_feats_dim = 4

    x = jax.random.normal(k_x, (N, C, H, W), dtype=jnp.float32)
    # Deterministic, nontrivial parameter init (synthetic, no checkpoint load).
    gamma = 1.0 + 0.1 * jax.random.normal(k_g, (C,), dtype=jnp.float32)
    beta = 0.1 * jax.random.normal(k_b, (C,), dtype=jnp.float32)
    conv_w = jax.random.normal(k_w, (C_out, C, 1, 1), dtype=jnp.float32) * (1.0 / jnp.sqrt(C))

    out = embedding_forward(x, gamma, beta, conv_w)
    jax.block_until_ready(out)

    ref = _reference(x, gamma, beta, conv_w)
    assert out.shape == (N, C_out, H, W)
    assert jnp.allclose(out, ref, atol=1e-4, rtol=1e-4)

    print("KERNEL_OK")
</pallas_src>

<mosaic_0001>
module attributes {stable_mosaic.version = 11 : i64} {
  func.func @_fused_kernel(%arg0: i32, %arg1: i32, %arg2: i32, %arg3: memref<1x64x256xf32, #tpu.memory_space<vmem>>, %arg4: memref<64x1xf32, #tpu.memory_space<vmem>>, %arg5: memref<64x1xf32, #tpu.memory_space<vmem>>, %arg6: memref<4x64xf32, #tpu.memory_space<vmem>>, %arg7: memref<1x4x256xf32, #tpu.memory_space<vmem>>, %arg8: memref<64x1xf32, #tpu.memory_space<vmem>>, %arg9: memref<64x1xf32, #tpu.memory_space<vmem>>) attributes {dimension_semantics = [#tpu.dimension_semantics<arbitrary>, #tpu.dimension_semantics<arbitrary>, #tpu.dimension_semantics<arbitrary>], iteration_bounds = array<i64: 2, 2, 1>, scalar_prefetch = 0 : i64, scratch_operands = 2 : i64, tpu.core_type = #tpu.core_type<tc>, window_params = [{transform_indices = @transform_0, window_bounds = array<i64: 1, 64, 256>}, {pipeline_mode = #tpu.pipeline_mode<synchronous>, transform_indices = @transform_1, window_bounds = array<i64: 64, 1>}, {pipeline_mode = #tpu.pipeline_mode<synchronous>, transform_indices = @transform_2, window_bounds = array<i64: 64, 1>}, {pipeline_mode = #tpu.pipeline_mode<synchronous>, transform_indices = @transform_3, window_bounds = array<i64: 4, 64>}, {transform_indices = @transform_4, window_bounds = array<i64: 1, 4, 256>}]} {
    %c0_i32 = arith.constant 0 : i32
    %0 = arith.cmpi eq, %arg0, %c0_i32 : i32
    %1 = arith.extui %0 : i1 to i32
    %c0_i32_0 = arith.constant 0 : i32
    %2 = arith.cmpi ne, %1, %c0_i32_0 : i32
    scf.if %2 {
      %c0_i32_2 = arith.constant 0 : i32
      %6 = arith.cmpi eq, %arg1, %c0_i32_2 : i32
      %c0_i32_3 = arith.constant 0 : i32
      %7 = arith.cmpi eq, %arg2, %c0_i32_3 : i32
      %8 = arith.andi %6, %7 : i1
      %9 = arith.extui %8 : i1 to i32
      %c0_i32_4 = arith.constant 0 : i32
      %10 = arith.cmpi ne, %9, %c0_i32_4 : i32
      scf.if %10 {
        %cst_19 = arith.constant 0.000000e+00 : f32
        %29 = vector.broadcast %cst_19 : f32 to vector<64x1xf32>
        %c0_20 = arith.constant 0 : index
        %c0_21 = arith.constant 0 : index
        %30 = vector.load %arg8[%c0_20, %c0_21] : memref<64x1xf32, #tpu.memory_space<vmem>>, vector<64x1xf32>
        tpu.vector_store %arg8[%c0_20, %c0_21], %29 {strides = array<i32>} : memref<64x1xf32, #tpu.memory_space<vmem>>, vector<64x1xf32>,
        %cst_22 = arith.constant 0.000000e+00 : f32
        %31 = vector.broadcast %cst_22 : f32 to vector<64x1xf32>
        %c0_23 = arith.constant 0 : index
        %c0_24 = arith.constant 0 : index
        %32 = vector.load %arg9[%c0_23, %c0_24] : memref<64x1xf32, #tpu.memory_space<vmem>>, vector<64x1xf32>
        tpu.vector_store %arg9[%c0_23, %c0_24], %31 {strides = array<i32>} : memref<64x1xf32, #tpu.memory_space<vmem>>, vector<64x1xf32>,
      } else {
      }
      %c0 = arith.constant 0 : index
      %c0_5 = arith.constant 0 : index
      %c0_6 = arith.constant 0 : index
      %11 = vector.load %arg3[%c0, %c0_5, %c0_6] : memref<1x64x256xf32, #tpu.memory_space<vmem>>, vector<1x64x256xf32>
      %12 = vector.shape_cast %11 : vector<1x64x256xf32> to vector<64x256xf32>
      %c0_7 = arith.constant 0 : index
      %c0_8 = arith.constant 0 : index
      %13 = vector.load %arg8[%c0_7, %c0_8] : memref<64x1xf32, #tpu.memory_space<vmem>>, vector<64x1xf32>
      %cst = arith.constant dense<0.000000e+00> : vector<64xf32>
      %14 = vector.multi_reduction <add>, %12, %cst [1] : vector<64x256xf32> to vector<64xf32>
      %15 = vector.shape_cast %14 : vector<64xf32> to vector<64x1xf32>
      %16 = arith.addf %13, %15 : vector<64x1xf32>
      %c0_9 = arith.constant 0 : index
      %c0_10 = arith.constant 0 : index
      %17 = vector.load %arg8[%c0_9, %c0_10] : memref<64x1xf32, #tpu.memory_space<vmem>>, vector<64x1xf32>
      tpu.vector_store %arg8[%c0_9, %c0_10], %16 {strides = array<i32>} : memref<64x1xf32, #tpu.memory_space<vmem>>, vector<64x1xf32>,
      %c0_11 = arith.constant 0 : index
      %c0_12 = arith.constant 0 : index
      %18 = vector.load %arg9[%c0_11, %c0_12] : memref<64x1xf32, #tpu.memory_space<vmem>>, vector<64x1xf32>
      %19 = arith.mulf %12, %12 : vector<64x256xf32>
      %cst_13 = arith.constant dense<0.000000e+00> : vector<64xf32>
      %20 = vector.multi_reduction <add>, %19, %cst_13 [1] : vector<64x256xf32> to vector<64xf32>
      %21 = vector.shape_cast %20 : vector<64xf32> to vector<64x1xf32>
      %22 = arith.addf %18, %21 : vector<64x1xf32>
      %c0_14 = arith.constant 0 : index
      %c0_15 = arith.constant 0 : index
      %23 = vector.load %arg9[%c0_14, %c0_15] : memref<64x1xf32, #tpu.memory_space<vmem>>, vector<64x1xf32>
      tpu.vector_store %arg9[%c0_14, %c0_15], %22 {strides = array<i32>} : memref<64x1xf32, #tpu.memory_space<vmem>>, vector<64x1xf32>,
      %c1_i32_16 = arith.constant 1 : i32
      %24 = arith.cmpi eq, %arg1, %c1_i32_16 : i32
      %c0_i32_17 = arith.constant 0 : i32
      %25 = arith.cmpi eq, %arg2, %c0_i32_17 : i32
      %26 = arith.andi %24, %25 : i1
      %27 = arith.extui %26 : i1 to i32
      %c0_i32_18 = arith.constant 0 : i32
      %28 = arith.cmpi ne, %27, %c0_i32_18 : i32
      scf.if %28 {
        %c0_19 = arith.constant 0 : index
        %c0_20 = arith.constant 0 : index
        %29 = vector.load %arg8[%c0_19, %c0_20] : memref<64x1xf32, #tpu.memory_space<vmem>>, vector<64x1xf32>
        %cst_21 = arith.constant 0.001953125 : f32
        %30 = vector.broadcast %cst_21 : f32 to vector<64x1xf32>
        %31 = arith.mulf %29, %30 : vector<64x1xf32>
        %c0_22 = arith.constant 0 : index
        %c0_23 = arith.constant 0 : index
        %32 = vector.load %arg9[%c0_22, %c0_23] : memref<64x1xf32, #tpu.memory_space<vmem>>, vector<64x1xf32>
        %cst_24 = arith.constant 0.001953125 : f32
        %33 = vector.broadcast %cst_24 : f32 to vector<64x1xf32>
        %34 = arith.mulf %32, %33 : vector<64x1xf32>
        %35 = arith.mulf %31, %31 : vector<64x1xf32>
        %36 = arith.subf %34, %35 : vector<64x1xf32>
        %cst_25 = arith.constant 0.000000e+00 : f32
        %37 = vector.broadcast %cst_25 : f32 to vector<64x1xf32>
        %38 = arith.maximumf %36, %37 : vector<64x1xf32>
        %c0_26 = arith.constant 0 : index
        %c0_27 = arith.constant 0 : index
        %39 = vector.load %arg4[%c0_26, %c0_27] : memref<64x1xf32, #tpu.memory_space<vmem>>, vector<64x1xf32>
        %cst_28 = arith.constant 9.99999974E-6 : f32
        %40 = vector.broadcast %cst_28 : f32 to vector<64x1xf32>
        %41 = arith.addf %38, %40 : vector<64x1xf32>
        %42 = math.rsqrt %41 : vector<64x1xf32>
        %43 = arith.mulf %39, %42 : vector<64x1xf32>
        %c0_29 = arith.constant 0 : index
        %c0_30 = arith.constant 0 : index
        %44 = vector.load %arg8[%c0_29, %c0_30] : memref<64x1xf32, #tpu.memory_space<vmem>>, vector<64x1xf32>
        tpu.vector_store %arg8[%c0_29, %c0_30], %43 {strides = array<i32>} : memref<64x1xf32, #tpu.memory_space<vmem>>, vector<64x1xf32>,
        %c0_31 = arith.constant 0 : index
        %c0_32 = arith.constant 0 : index
        %45 = vector.load %arg5[%c0_31, %c0_32] : memref<64x1xf32, #tpu.memory_space<vmem>>, vector<64x1xf32>
        %46 = arith.mulf %31, %43 : vector<64x1xf32>
        %47 = arith.subf %45, %46 : vector<64x1xf32>
        %c0_33 = arith.constant 0 : index
        %c0_34 = arith.constant 0 : index
        %48 = vector.load %arg9[%c0_33, %c0_34] : memref<64x1xf32, #tpu.memory_space<vmem>>, vector<64x1xf32>
        tpu.vector_store %arg9[%c0_33, %c0_34], %47 {strides = array<i32>} : memref<64x1xf32, #tpu.memory_space<vmem>>, vector<64x1xf32>,
      } else {
      }
    } else {
    }
    %c1_i32 = arith.constant 1 : i32
    %3 = arith.cmpi eq, %arg0, %c1_i32 : i32
    %4 = arith.extui %3 : i1 to i32
    %c0_i32_1 = arith.constant 0 : i32
    %5 = arith.cmpi ne, %4, %c0_i32_1 : i32
    scf.if %5 {
      %c0 = arith.constant 0 : index
      %c0_2 = arith.constant 0 : index
      %c0_3 = arith.constant 0 : index
      %6 = vector.load %arg3[%c0, %c0_2, %c0_3] : memref<1x64x256xf32, #tpu.memory_space<vmem>>, vector<1x64x256xf32>
      %7 = vector.shape_cast %6 : vector<1x64x256xf32> to vector<64x256xf32>
      %c0_4 = arith.constant 0 : index
      %c0_5 = arith.constant 0 : index
      %8 = vector.load %arg8[%c0_4, %c0_5] : memref<64x1xf32, #tpu.memory_space<vmem>>, vector<64x1xf32>
      %9 = vector.broadcast %8 : vector<64x1xf32> to vector<64x256xf32>
      %10 = arith.mulf %7, %9 : vector<64x256xf32>
      %c0_6 = arith.constant 0 : index
      %c0_7 = arith.constant 0 : index
      %11 = vector.load %arg9[%c0_6, %c0_7] : memref<64x1xf32, #tpu.memory_space<vmem>>, vector<64x1xf32>
      %12 = vector.broadcast %11 : vector<64x1xf32> to vector<64x256xf32>
      %13 = arith.addf %10, %12 : vector<64x256xf32>
      %cst = arith.constant 0.000000e+00 : f32
      %14 = vector.broadcast %cst : f32 to vector<64x256xf32>
      %15 = arith.maximumf %13, %14 : vector<64x256xf32>
      %c0_8 = arith.constant 0 : index
      %c0_9 = arith.constant 0 : index
      %16 = vector.load %arg6[%c0_8, %c0_9] : memref<4x64xf32, #tpu.memory_space<vmem>>, vector<4x64xf32>
      %cst_10 = arith.constant dense<0.000000e+00> : vector<4x256xf32>
      %17 = tpu.matmul %16, %15, %cst_10 {dimension_numbers = #tpu.dot_dimension_numbers<[1], [0], [0], [1], [0, 0, 1, 1], [], []>} : vector<4x64xf32>, vector<64x256xf32>, vector<4x256xf32> -> vector<4x256xf32>
      %c0_11 = arith.constant 0 : index
      %c0_12 = arith.constant 0 : index
      %c0_13 = arith.constant 0 : index
      %18 = vector.load %arg7[%c0_11, %c0_12, %c0_13] : memref<1x4x256xf32, #tpu.memory_space<vmem>>, vector<1x4x256xf32>
      %19 = vector.shape_cast %18 : vector<1x4x256xf32> to vector<4x256xf32>
      %20 = vector.shape_cast %17 : vector<4x256xf32> to vector<1x4x256xf32>
      tpu.vector_store %arg7[%c0_11, %c0_12, %c0_13], %20 {strides = array<i32>} : memref<1x4x256xf32, #tpu.memory_space<vmem>>, vector<1x4x256xf32>,
    } else {
    }
    return
  }
  func.func @transform_0(%arg0: i32, %arg1: i32, %arg2: i32) -> (i32, i32, i32) {
    %c0_i32 = arith.constant 0 : i32
    %c0_i32_0 = arith.constant 0 : i32
    return %arg1, %c0_i32, %arg2 : i32, i32, i32
  }
  func.func @transform_1(%arg0: i32, %arg1: i32, %arg2: i32) -> (i32, i32) {
    %c0_i32 = arith.constant 0 : i32
    %c0_i32_0 = arith.constant 0 : i32
    %c0_i32_1 = arith.constant 0 : i32
    return %c0_i32, %c0_i32_0 : i32, i32
  }
  func.func @transform_2(%arg0: i32, %arg1: i32, %arg2: i32) -> (i32, i32) {
    %c0_i32 = arith.constant 0 : i32
    %c0_i32_0 = arith.constant 0 : i32
    %c0_i32_1 = arith.constant 0 : i32
    return %c0_i32, %c0_i32_0 : i32, i32
  }
  func.func @transform_3(%arg0: i32, %arg1: i32, %arg2: i32) -> (i32, i32) {
    %c0_i32 = arith.constant 0 : i32
    %c0_i32_0 = arith.constant 0 : i32
    %c0_i32_1 = arith.constant 0 : i32
    return %c0_i32, %c0_i32_0 : i32, i32
  }
  func.func @transform_4(%arg0: i32, %arg1: i32, %arg2: i32) -> (i32, i32, i32) {
    %0 = arith.muli %arg1, %arg0 : i32
    %1 = arith.muli %arg2, %arg0 : i32
    %c0_i32 = arith.constant 0 : i32
    %c0_i32_0 = arith.constant 0 : i32
    return %0, %c0_i32, %1 : i32, i32, i32
  }
}

</mosaic_0001>

<llo_original>
// kernel: tpu_custom_call.1
$region0: #{tpu_custom_call.1}
  #allocation0 [shape = 'u32[]', space=smem, size = 0x4, offset = 0x4, fixed_abs, tag = 'smem constant byte address 0x4 - core index']
  #allocation1 [shape = 'u32[72,128]{1,0:T(1,128)}', space=vmem, size = 0x9000, scoped, tag = 'internal scratch']
  #allocation2 [shape = 'f32[64,1]{1,0:T(8,128)}', space=vmem, size = 0x8000, scoped, tag = 'scratch operand']
  #allocation3 [shape = 'f32[64,1]{1,0:T(8,128)}', space=vmem, size = 0x8000, scoped, tag = 'scratch operand']
  %s0 = inlined_call_operand.hbm [shape: f32[2,64,256], index: 0, kind: input, shape index: {}]
  %s1 = inlined_call_operand.vmem [shape: f32[64,1], index: 1, kind: input, shape index: {}]
  %s2 = inlined_call_operand.vmem [shape: f32[64,1], index: 2, kind: input, shape index: {}]
  %s3 = inlined_call_operand.vmem [shape: f32[4,64], index: 3, kind: input, shape index: {}]
  %s4 = inlined_call_operand.hbm [shape: f32[2,4,256], index: 4, kind: output, shape index: {}]
  %s5 = sld [smem:[#allocation0]]
  $region69: #{tpu_custom_call.1} parent=0
    _
  %s7 = ssub.s32 1, %s5
  %s8 = scalar_select 0, %s7, %s5
  $region1: #{tpu_custom_call.1} parent=0
    #allocation4 [shape = 'u8[131072]{0}', space=vmem, size = 0x20000, scoped, tag = 'input window, operand 0']
    #allocation5 [shape = 's32[2]{0}', space=sflag, size = 0x8, scoped, tag = 'scoped memory for tpu_custom_call.1']
    #allocation6 [shape = 's32[2]{0}', space=sflag, size = 0x8, scoped, tag = 'scoped memory for tpu_custom_call.1']
    #allocation7 [shape = 'u8[8192]{0}', space=vmem, size = 0x2000, scoped, tag = 'output window, operand 0']
    %9 = vsyncpa [#allocation5], 0
    %s10 = scalar_lea.sflag [#allocation5], 1
    %11 = vsyncpa %s10, 0
    %12 = vsyncpa [#allocation6], 0
    %s13 = scalar_lea.sflag [#allocation6], 1
    %14 = vsyncpa %s13, 0
    loop: start=0, step=1, limit=6
    $region2: #{tpu_custom_call.1} parent=1 // loop_pre_header
      _
    $region3: #{tpu_custom_call.1} parent=1 // loop_header
      %s16 = sphi 0, %s20
      %p17 = scmp.ge.s32.totalorder %s16, 6
      %s23 = sphi 0, %s42
      %s24 = sphi 0, %s38
      %s25 = sphi 0, %s34
      %s26 = sphi 0, %s23
      %s27 = sphi 0, %s24
      %s28 = sphi 0, %s25
      %s29 = sphi 0, %s26
      %s30 = sphi 0, %s27
      %s31 = sphi 0, %s28
      %s47 = sphi 0, %s49
      %s50 = sphi 0, %s47
      %s51 = sphi 0, %s50
      %s67 = sphi 0, %s51
      %s71 = sphi 0, %s71
      %s73 = sphi 0, %s71
      %s74 = sphi 0, %s73
      %s88 = sphi 0, %s74
      %s92 = sphi 0, %s92
      %s94 = sphi 0, %s92
      %s95 = sphi 0, %s94
      %s109 = sphi 0, %s95
      %s113 = sphi 0, %s113
      %s115 = sphi 0, %s113
      %s116 = sphi 0, %s115
      %s130 = sphi 0, %s116
      %s142 = sphi 0, %s144
      %s145 = sphi 0, %s142
      %s146 = sphi 0, %s145
      %s162 = sphi 0, %s146
    $region4: #{tpu_custom_call.1} parent=1 // loop_header_branch
      %19 = sbr.rel (%p17) target = $region8
    $region5: #{tpu_custom_call.1} parent=1 // loop_body
      %s21 = ssub.s32 %s16, 1
      %s22 = ssub.s32 %s16, 2
      %s32 = sadd.s32 1, %s25
      %p33 = scmp.ge.s32.totalorder %s32, 1
      %s34 = scalar_select %p33, 0, %s32
      %s35 = sadd.s32 1, %s24
      %s36 = scalar_select %p33, %s35, %s24
      %p37 = scmp.ge.s32.totalorder %s36, 2
      %s38 = scalar_select %p37, 0, %s36
      %s39 = sadd.s32 1, %s23
      %s40 = scalar_select %p37, %s39, %s23
      %p41 = scmp.ge.s32.totalorder %s40, 2
      %s42 = scalar_select %p41, 0, %s40
      %s43 = ssub.s32 %s24, %s38
      %s44 = ssub.s32 %s25, %s34
      %s45 = sor.u32 %s43, %s44
      %p46 = scmp.eq.s32.totalorder %s45, 0
      %s48 = sadd.s32 %s47, 1
      %s49 = scalar_select %p46, %s47, %s48
      %p52 = pneg %p46
      %p53 = scmp.eq.s32.totalorder %s16, 3
      %p54 = por %p52, %p53
      %p55 = scmp.ne.s32.totalorder %s47, %s50
      %p56 = scmp.eq.s32.totalorder %s16, 0
      %p57 = por %p55, %p56
      %p58 = scmp.ne.s32.totalorder %s47, %s50
      %p59 = scmp.eq.s32.totalorder %s21, 3
      %p60 = por %p58, %p59
      %p61 = scmp.ne.s32.totalorder %s50, %s51
      %p62 = scmp.eq.s32.totalorder %s21, 0
      %p63 = por %p61, %p62
      %p64 = scmp.ne.s32.totalorder %s50, %s51
      %p65 = scmp.eq.s32.totalorder %s22, 3
      %p66 = por %p64, %p65
      %p68 = scmp.ne.s32.totalorder %s51, %s67
      %p69 = scmp.eq.s32.totalorder %s22, 0
      %p70 = por %p68, %p69
      %s72 = sadd.s32 %s71, 1
      %p75 = scmp.eq.s32.totalorder %s16, 3
      %p76 = scmp.ne.s32.totalorder %s71, %s73
      %p77 = scmp.eq.s32.totalorder %s16, 0
      %p78 = por %p76, %p77
      %p79 = scmp.ne.s32.totalorder %s71, %s73
      %p80 = scmp.eq.s32.totalorder %s21, 3
      %p81 = por %p79, %p80
      %p82 = scmp.ne.s32.totalorder %s73, %s74
      %p83 = scmp.eq.s32.totalorder %s21, 0
      %p84 = por %p82, %p83
      %p85 = scmp.ne.s32.totalorder %s73, %s74
      %p86 = scmp.eq.s32.totalorder %s22, 3
      %p87 = por %p85, %p86
      %p89 = scmp.ne.s32.totalorder %s74, %s88
      %p90 = scmp.eq.s32.totalorder %s22, 0
      %p91 = por %p89, %p90
      %s93 = sadd.s32 %s92, 1
      %p96 = scmp.eq.s32.totalorder %s16, 3
      %p97 = scmp.ne.s32.totalorder %s92, %s94
      %p98 = scmp.eq.s32.totalorder %s16, 0
      %p99 = por %p97, %p98
      %p100 = scmp.ne.s32.totalorder %s92, %s94
      %p101 = scmp.eq.s32.totalorder %s21, 3
      %p102 = por %p100, %p101
      %p103 = scmp.ne.s32.totalorder %s94, %s95
      %p104 = scmp.eq.s32.totalorder %s21, 0
      %p105 = por %p103, %p104
      %p106 = scmp.ne.s32.totalorder %s94, %s95
      %p107 = scmp.eq.s32.totalorder %s22, 3
      %p108 = por %p106, %p107
      %p110 = scmp.ne.s32.totalorder %s95, %s109
      %p111 = scmp.eq.s32.totalorder %s22, 0
      %p112 = por %p110, %p111
      %s114 = sadd.s32 %s113, 1
      %p117 = scmp.eq.s32.totalorder %s16, 3
      %p118 = scmp.ne.s32.totalorder %s113, %s115
      %p119 = scmp.eq.s32.totalorder %s16, 0
      %p120 = por %p118, %p119
      %p121 = scmp.ne.s32.totalorder %s113, %s115
      %p122 = scmp.eq.s32.totalorder %s21, 3
      %p123 = por %p121, %p122
      %p124 = scmp.ne.s32.totalorder %s115, %s116
      %p125 = scmp.eq.s32.totalorder %s21, 0
      %p126 = por %p124, %p125
      %p127 = scmp.ne.s32.totalorder %s115, %s116
      %p128 = scmp.eq.s32.totalorder %s22, 3
      %p129 = por %p127, %p128
      %p131 = scmp.ne.s32.totalorder %s116, %s130
      %p132 = scmp.eq.s32.totalorder %s22, 0
      %p133 = por %p131, %p132
      %s134 = smul.u32 %s24, %s23
      %s135 = smul.u32 %s25, %s23
      %s136 = smul.u32 %s38, %s42
      %s137 = smul.u32 %s34, %s42
      %s138 = ssub.s32 %s134, %s136
      %s139 = ssub.s32 %s135, %s137
      %s140 = sor.u32 %s138, %s139
      %p141 = scmp.eq.s32.totalorder %s140, 0
      %s143 = sadd.s32 %s142, 1
      %s144 = scalar_select %p141, %s142, %s143
      %p147 = pneg %p141
      %p148 = scmp.eq.s32.totalorder %s16, 3
      %p149 = por %p147, %p148
      %p150 = scmp.ne.s32.totalorder %s142, %s145
      %p151 = scmp.eq.s32.totalorder %s16, 0
      %p152 = por %p150, %p151
      %p153 = scmp.ne.s32.totalorder %s142, %s145
      %p154 = scmp.eq.s32.totalorder %s21, 3
      %p155 = por %p153, %p154
      %p156 = scmp.ne.s32.totalorder %s145, %s146
      %p157 = scmp.eq.s32.totalorder %s21, 0
      %p158 = por %p156, %p157
      %p159 = scmp.ne.s32.totalorder %s145, %s146
      %p160 = scmp.eq.s32.totalorder %s22, 3
      %p161 = por %p159, %p160
      %p163 = scmp.ne.s32.totalorder %s146, %s162
      %p164 = scmp.eq.s32.totalorder %s22, 0
      %p165 = por %p163, %p164
      %p166 = scmp.le.s32.totalorder 1, %s16
      %p167 = scmp.lt.s32.totalorder %s16, 5
      %p168 = pnand %p166, %p167
      %p169 = pneg %p168
      // Predicated region
      $region9: #{tpu_custom_call.1} parent=5 // pred_check
        _
      $region10: #{tpu_custom_call.1} parent=5 // pred_check_branch
        %171 = sbr.rel (%p168) target = $region12
      $region11: #{tpu_custom_call.1} parent=5 // pred_region
        %s172 = ssub.s32 %s16, 1
        // Predicated region
        $region13: #{tpu_custom_call.1} parent=11 // pred_check
          %p173 = pneg %p84
        $region14: #{tpu_custom_call.1} parent=11 // pred_check_branch
          %175 = sbr.rel (%p173) target = $region16
        $region15: #{tpu_custom_call.1} parent=11 // pred_region
          _
        $region16: #{tpu_custom_call.1} parent=11 // pred_fallthru
          _
        // Predicated region
        $region17: #{tpu_custom_call.1} parent=11 // pred_check
          %p176 = pneg %p105
        $region18: #{tpu_custom_call.1} parent=11 // pred_check_branch
          %178 = sbr.rel (%p176) target = $region20
        $region19: #{tpu_custom_call.1} parent=11 // pred_region
          _
        $region20: #{tpu_custom_call.1} parent=11 // pred_fallthru
          _
        // Predicated region
        $region21: #{tpu_custom_call.1} parent=11 // pred_check
          %p179 = pneg %p126
        $region22: #{tpu_custom_call.1} parent=11 // pred_check_branch
          %181 = sbr.rel (%p179) target = $region24
        $region23: #{tpu_custom_call.1} parent=11 // pred_region
          _
        $region24: #{tpu_custom_call.1} parent=11 // pred_fallthru
          _
      $region12: #{tpu_custom_call.1} parent=5 // pred_fallthru
        _
      %p182 = scmp.lt.s32.totalorder %s16, 4
      // Predicated region
      $region25: #{tpu_custom_call.1} parent=5 // pred_check
        %p183 = pneg %p182
      $region26: #{tpu_custom_call.1} parent=5 // pred_check_branch
        %185 = sbr.rel (%p183) target = $region28
      $region27: #{tpu_custom_call.1} parent=5 // pred_region
        // Predicated region
        $region29: #{tpu_custom_call.1} parent=27 // pred_check
          %p186 = pneg %p57
        $region30: #{tpu_custom_call.1} parent=27 // pred_check_branch
          %188 = sbr.rel (%p186) target = $region32
        $region31: #{tpu_custom_call.1} parent=27 // pred_region
          %s189 = sand.u32 %s47, 1
          %s190 = scalar_lea.sflag [#allocation5], %s189
          %s191 = sand.u32 %s47, 1
          %s192 = smul.addr %s191, 128
          %s193 = scalar_lea.vmem [#allocation4], %s192
          %s194 = smul.u32 2, %s25
          %196 = vsyncadd %s190, 0
          %s197 = smul.addr %s24, 16
          %s198 = sadd.s32 %s194, %s197
          %s199 = smul.addr %s198, 8
          %s200 = scalar_lea.hbm %s0, %s199
          %s201 = sshll.u32 %s200, 4
          %s202 = int_to_ptr.hbm [resolvable:$true] %s201
          %s203 = sshll.u32 %s193, 4
          %s204 = int_to_ptr.vmem [resolvable:$true] %s203
          %209 = dma.hbm_to_vmem [thread:$0]  %s202, 2048, %s204, %s190, 256, 256, 16
        $region32: #{tpu_custom_call.1} parent=27 // pred_fallthru
          _
      $region28: #{tpu_custom_call.1} parent=5 // pred_fallthru
        _
      %p210 = scmp.le.s32.totalorder 1, %s16
      %p211 = scmp.lt.s32.totalorder %s16, 5
      %p212 = pnand %p210, %p211
      %p213 = pneg %p212
      // Predicated region
      $region33: #{tpu_custom_call.1} parent=5 // pred_check
        _
      $region34: #{tpu_custom_call.1} parent=5 // pred_check_branch
        %215 = sbr.rel (%p212) target = $region36
      $region35: #{tpu_custom_call.1} parent=5 // pred_region
        %s216 = ssub.s32 %s16, 1
        %s217 = sand.u32 %s50, 1
        %s218 = scalar_lea.sflag [#allocation5], %s217
        %s219 = sand.u32 %s50, 1
        %s220 = smul.addr %s219, 128
        %s221 = scalar_lea.vmem [#allocation4], %s220
        // Predicated region
        $region37: #{tpu_custom_call.1} parent=35 // pred_check
          %p222 = pneg %p63
        $region38: #{tpu_custom_call.1} parent=35 // pred_check_branch
          %224 = sbr.rel (%p222) target = $region40
        $region39: #{tpu_custom_call.1} parent=35 // pred_region
          %226 = dma.done %s218, 2048
        $region40: #{tpu_custom_call.1} parent=35 // pred_fallthru
          _
        %s227 = sand.u32 %s50, 1
        %s228 = scalar_lea.sflag [#allocation5], %s227
        %s229 = sand.u32 %s50, 1
        %s230 = smul.addr %s229, 128
        %s231 = scalar_lea.vmem [#allocation4], %s230
        %p232 = pneg %p63
        %p233 = pneg %p60
        %p234 = pneg %p84
        %p235 = pneg %p81
        %p236 = pneg %p105
        %p237 = pneg %p102
        %p238 = pneg %p126
        %p239 = pneg %p123
        %p240 = pneg %p158
        %p241 = pneg %p155
        %s242 = sand.u32 %s145, 1
        %s243 = scalar_lea.sflag [#allocation6], %s242
        %s244 = sand.u32 %s145, 1
        %s245 = smul.addr %s244, 8
        %s246 = scalar_lea.vmem [#allocation7], %s245
        %s247 = smul.u32 2, %s28
        %s248 = smul.u32 %s27, %s26
        %s249 = smul.u32 %s28, %s26
        %s250 = smul.u32 2, %s249
        %p251 = scmp.eq.s32.totalorder %s26, 0
        // Predicated region
        $region41: #{tpu_custom_call.1} parent=35 // pred_check
          %p252 = pneg %p251
        $region42: #{tpu_custom_call.1} parent=35 // pred_check_branch
          %254 = sbr.rel (%p252) target = $region44
        $region43: #{tpu_custom_call.1} parent=35 // pred_region
          %p255 = scmp.eq.s32.totalorder %s27, 0
          %p256 = scmp.eq.s32.totalorder %s28, 0
          %p257 = pnand %p255, %p256
          %p258 = pneg %p257
          // Predicated region
          $region45: #{tpu_custom_call.1} parent=43 // pred_check
            _
          $region46: #{tpu_custom_call.1} parent=43 // pred_check_branch
            %260 = sbr.rel (%p257) target = $region48
          $region47: #{tpu_custom_call.1} parent=43 // pred_region
            %vm261 = vcmask 7168
            %262 = vst.msk [vmem:[#allocation2] sm:$0xff] %vm261, 0.0
            %263 = vst.msk [vmem:[#allocation2 + $0x8] sm:$0xff] %vm261, 0.0
            %264 = vst.msk [vmem:[#allocation2 + $0x10] sm:$0xff] %vm261, 0.0
            %265 = vst.msk [vmem:[#allocation2 + $0x18] sm:$0xff] %vm261, 0.0
            %266 = vst.msk [vmem:[#allocation2 + $0x20] sm:$0xff] %vm261, 0.0
            %267 = vst.msk [vmem:[#allocation2 + $0x28] sm:$0xff] %vm261, 0.0
            %268 = vst.msk [vmem:[#allocation2 + $0x30] sm:$0xff] %vm261, 0.0
            %269 = vst.msk [vmem:[#allocation2 + $0x38] sm:$0xff] %vm261, 0.0
            %270 = vst.msk [vmem:[#allocation3] sm:$0xff] %vm261, 0.0
            %271 = vst.msk [vmem:[#allocation3 + $0x8] sm:$0xff] %vm261, 0.0
            %272 = vst.msk [vmem:[#allocation3 + $0x10] sm:$0xff] %vm261, 0.0
            %273 = vst.msk [vmem:[#allocation3 + $0x18] sm:$0xff] %vm261, 0.0
            %274 = vst.msk [vmem:[#allocation3 + $0x20] sm:$0xff] %vm261, 0.0
            %275 = vst.msk [vmem:[#allocation3 + $0x28] sm:$0xff] %vm261, 0.0
            %276 = vst.msk [vmem:[#allocation3 + $0x30] sm:$0xff] %vm261, 0.0
            %277 = vst.msk [vmem:[#allocation3 + $0x38] sm:$0xff] %vm261, 0.0
          $region48: #{tpu_custom_call.1} parent=43 // pred_fallthru
            _
          %v278 = vld [vmem:[%s221] sm:$0xff]
          %v279 = vld [vmem:[%s221 + $0x8] sm:$0xff]
          %v280 = vld [vmem:[%s221 + $0x10] sm:$0xff]
          %v281 = vld [vmem:[%s221 + $0x18] sm:$0xff]
          %v282 = vld [vmem:[%s221 + $0x20] sm:$0xff]
          %v283 = vld [vmem:[%s221 + $0x28] sm:$0xff]
          %v284 = vld [vmem:[%s221 + $0x30] sm:$0xff]
          %v285 = vld [vmem:[%s221 + $0x38] sm:$0xff]
          %v286 = vld [vmem:[%s221 + $0x40] sm:$0xff]
          %v287 = vld [vmem:[%s221 + $0x48] sm:$0xff]
          %v288 = vld [vmem:[%s221 + $0x50] sm:$0xff]
          %v289 = vld [vmem:[%s221 + $0x58] sm:$0xff]
          %v290 = vld [vmem:[%s221 + $0x60] sm:$0xff]
          %v291 = vld [vmem:[%s221 + $0x68] sm:$0xff]
          %v292 = vld [vmem:[%s221 + $0x70] sm:$0xff]
          %v293 = vld [vmem:[%s221 + $0x78] sm:$0xff]
          %v294 = vld [vmem:[#allocation2] sm:$0xff]
          %v295 = vld [vmem:[#allocation2 + $0x8] sm:$0xff]
          %v296 = vld [vmem:[#allocation2 + $0x10] sm:$0xff]
          %v297 = vld [vmem:[#allocation2 + $0x18] sm:$0xff]
          %v298 = vld [vmem:[#allocation2 + $0x20] sm:$0xff]
          %v299 = vld [vmem:[#allocation2 + $0x28] sm:$0xff]
          %v300 = vld [vmem:[#allocation2 + $0x30] sm:$0xff]
          %v301 = vld [vmem:[#allocation2 + $0x38] sm:$0xff]
          %v302 = vadd.f32 %v278, %v279
          %303 = vadd.xlane.f32.xlu0 %v302
          %v304 = vpop.xlane.xlu0 %303
          %v305 = vadd.f32 %v280, %v281
          %306 = vadd.xlane.f32.xlu0 %v305
          %v307 = vpop.xlane.xlu0 %306
          %v308 = vadd.f32 %v282, %v283
          %309 = vadd.xlane.f32.xlu0 %v308
          %v310 = vpop.xlane.xlu0 %309
          %v311 = vadd.f32 %v284, %v285
          %312 = vadd.xlane.f32.xlu0 %v311
          %v313 = vpop.xlane.xlu0 %312
          %v314 = vadd.f32 %v286, %v287
          %315 = vadd.xlane.f32.xlu0 %v314
          %v316 = vpop.xlane.xlu0 %315
          %v317 = vadd.f32 %v288, %v289
          %318 = vadd.xlane.f32.xlu0 %v317
          %v319 = vpop.xlane.xlu0 %318
          %v320 = vadd.f32 %v290, %v291
          %321 = vadd.xlane.f32.xlu0 %v320
          %v322 = vpop.xlane.xlu0 %321
          %v323 = vadd.f32 %v292, %v293
          %324 = vadd.xlane.f32.xlu0 %v323
          %v325 = vpop.xlane.xlu0 %324
          %v326 = vadd.f32 %v294, %v304
          %v327 = vadd.f32 %v295, %v307
          %v328 = vadd.f32 %v296, %v310
          %v329 = vadd.f32 %v297, %v313
          %v330 = vadd.f32 %v298, %v316
          %v331 = vadd.f32 %v299, %v319
          %v332 = vadd.f32 %v300, %v322
          %v333 = vadd.f32 %v301, %v325
          %vm334 = vcmask 7168
          %335 = vst.msk [vmem:[#allocation2] sm:$0xff] %vm334, %v326
          %336 = vst.msk [vmem:[#allocation2 + $0x8] sm:$0xff] %vm334, %v327
          %337 = vst.msk [vmem:[#allocation2 + $0x10] sm:$0xff] %vm334, %v328
          %338 = vst.msk [vmem:[#allocation2 + $0x18] sm:$0xff] %vm334, %v329
          %339 = vst.msk [vmem:[#allocation2 + $0x20] sm:$0xff] %vm334, %v330
          %340 = vst.msk [vmem:[#allocation2 + $0x28] sm:$0xff] %vm334, %v331
          %341 = vst.msk [vmem:[#allocation2 + $0x30] sm:$0xff] %vm334, %v332
          %342 = vst.msk [vmem:[#allocation2 + $0x38] sm:$0xff] %vm334, %v333
          %v343 = vld [vmem:[#allocation3] sm:$0xff]
          %v344 = vld [vmem:[#allocation3 + $0x8] sm:$0xff]
          %v345 = vld [vmem:[#allocation3 + $0x10] sm:$0xff]
          %v346 = vld [vmem:[#allocation3 + $0x18] sm:$0xff]
          %v347 = vld [vmem:[#allocation3 + $0x20] sm:$0xff]
          %v348 = vld [vmem:[#allocation3 + $0x28] sm:$0xff]
          %v349 = vld [vmem:[#allocation3 + $0x30] sm:$0xff]
          %v350 = vld [vmem:[#allocation3 + $0x38] sm:$0xff]
          %v351 = vmul.f32 %v278, %v278
          %v352 = vmul.f32 %v279, %v279
          %v353 = vmul.f32 %v280, %v280
          %v354 = vmul.f32 %v281, %v281
          %v355 = vmul.f32 %v282, %v282
          %v356 = vmul.f32 %v283, %v283
          %v357 = vmul.f32 %v284, %v284
          %v358 = vmul.f32 %v285, %v285
          %v359 = vmul.f32 %v286, %v286
          %v360 = vmul.f32 %v287, %v287
          %v361 = vmul.f32 %v288, %v288
          %v362 = vmul.f32 %v289, %v289
          %v363 = vmul.f32 %v290, %v290
          %v364 = vmul.f32 %v291, %v291
          %v365 = vmul.f32 %v292, %v292
          %v366 = vmul.f32 %v293, %v293
          %v367 = vadd.f32 %v351, %v352
          %368 = vadd.xlane.f32.xlu0 %v367
          %v369 = vpop.xlane.xlu0 %368
          %v370 = vadd.f32 %v353, %v354
          %371 = vadd.xlane.f32.xlu0 %v370
          %v372 = vpop.xlane.xlu0 %371
          %v373 = vadd.f32 %v355, %v356
          %374 = vadd.xlane.f32.xlu0 %v373
          %v375 = vpop.xlane.xlu0 %374
          %v376 = vadd.f32 %v357, %v358
          %377 = vadd.xlane.f32.xlu0 %v376
          %v378 = vpop.xlane.xlu0 %377
          %v379 = vadd.f32 %v359, %v360
          %380 = vadd.xlane.f32.xlu0 %v379
          %v381 = vpop.xlane.xlu0 %380
          %v382 = vadd.f32 %v361, %v362
          %383 = vadd.xlane.f32.xlu0 %v382
          %v384 = vpop.xlane.xlu0 %383
          %v385 = vadd.f32 %v363, %v364
          %386 = vadd.xlane.f32.xlu0 %v385
          %v387 = vpop.xlane.xlu0 %386
          %v388 = vadd.f32 %v365, %v366
          %389 = vadd.xlane.f32.xlu0 %v388
          %v390 = vpop.xlane.xlu0 %389
          %v391 = vadd.f32 %v343, %v369
          %v392 = vadd.f32 %v344, %v372
          %v393 = vadd.f32 %v345, %v375
          %v394 = vadd.f32 %v346, %v378
          %v395 = vadd.f32 %v347, %v381
          %v396 = vadd.f32 %v348, %v384
          %v397 = vadd.f32 %v349, %v387
          %v398 = vadd.f32 %v350, %v390
          %399 = vst.msk [vmem:[#allocation3] sm:$0xff] %vm334, %v391
          %400 = vst.msk [vmem:[#allocation3 + $0x8] sm:$0xff] %vm334, %v392
          %401 = vst.msk [vmem:[#allocation3 + $0x10] sm:$0xff] %vm334, %v393
          %402 = vst.msk [vmem:[#allocation3 + $0x18] sm:$0xff] %vm334, %v394
          %403 = vst.msk [vmem:[#allocation3 + $0x20] sm:$0xff] %vm334, %v395
          %404 = vst.msk [vmem:[#allocation3 + $0x28] sm:$0xff] %vm334, %v396
          %405 = vst.msk [vmem:[#allocation3 + $0x30] sm:$0xff] %vm334, %v397
          %406 = vst.msk [vmem:[#allocation3 + $0x38] sm:$0xff] %vm334, %v398
          %p407 = scmp.eq.s32.totalorder %s27, 1
          %p408 = pnand %p407, %p256
          %p409 = pneg %p408
          // Predicated region
          $region49: #{tpu_custom_call.1} parent=43 // pred_check
            _
          $region50: #{tpu_custom_call.1} parent=43 // pred_check_branch
            %411 = sbr.rel (%p408) target = $region52
          $region51: #{tpu_custom_call.1} parent=43 // pred_region
            %v412 = vld [vmem:[#allocation2] sm:$0xff]
            %v413 = vld [vmem:[#allocation2 + $0x8] sm:$0xff]
            %v414 = vld [vmem:[#allocation2 + $0x10] sm:$0xff]
            %v415 = vld [vmem:[#allocation2 + $0x18] sm:$0xff]
            %v416 = vld [vmem:[#allocation2 + $0x20] sm:$0xff]
            %v417 = vld [vmem:[#allocation2 + $0x28] sm:$0xff]
            %v418 = vld [vmem:[#allocation2 + $0x30] sm:$0xff]
            %v419 = vld [vmem:[#allocation2 + $0x38] sm:$0xff]
            %v420 = vmul.f32 %v412, 0.001953125
            %v421 = vmul.f32 %v413, 0.001953125
            %v422 = vmul.f32 %v414, 0.001953125
            %v423 = vmul.f32 %v415, 0.001953125
            %v424 = vmul.f32 %v416, 0.001953125
            %v425 = vmul.f32 %v417, 0.001953125
            %v426 = vmul.f32 %v418, 0.001953125
            %v427 = vmul.f32 %v419, 0.001953125
            %v428 = vld [vmem:[#allocation3] sm:$0xff]
            %v429 = vld [vmem:[#allocation3 + $0x8] sm:$0xff]
            %v430 = vld [vmem:[#allocation3 + $0x10] sm:$0xff]
            %v431 = vld [vmem:[#allocation3 + $0x18] sm:$0xff]
            %v432 = vld [vmem:[#allocation3 + $0x20] sm:$0xff]
            %v433 = vld [vmem:[#allocation3 + $0x28] sm:$0xff]
            %v434 = vld [vmem:[#allocation3 + $0x30] sm:$0xff]
            %v435 = vld [vmem:[#allocation3 + $0x38] sm:$0xff]
            %v436 = vmul.f32 %v428, 0.001953125
            %v437 = vmul.f32 %v429, 0.001953125
            %v438 = vmul.f32 %v430, 0.001953125
            %v439 = vmul.f32 %v431, 0.001953125
            %v440 = vmul.f32 %v432, 0.001953125
            %v441 = vmul.f32 %v433, 0.001953125
            %v442 = vmul.f32 %v434, 0.001953125
            %v443 = vmul.f32 %v435, 0.001953125
            %v444 = vmul.f32 %v420, %v420
            %v445 = vmul.f32 %v421, %v421
            %v446 = vmul.f32 %v422, %v422
            %v447 = vmul.f32 %v423, %v423
            %v448 = vmul.f32 %v424, %v424
            %v449 = vmul.f32 %v425, %v425
            %v450 = vmul.f32 %v426, %v426
            %v451 = vmul.f32 %v427, %v427
            %v452 = vsub.f32 %v436, %v444
            %v453 = vsub.f32 %v437, %v445
            %v454 = vsub.f32 %v438, %v446
            %v455 = vsub.f32 %v439, %v447
            %v456 = vsub.f32 %v440, %v448
            %v457 = vsub.f32 %v441, %v449
            %v458 = vsub.f32 %v442, %v450
            %v459 = vsub.f32 %v443, %v451
            %v460 = vmax.f32 %v452, 0.0
            %v461 = vmax.f32 %v453, 0.0
            %v462 = vmax.f32 %v454, 0.0
            %v463 = vmax.f32 %v455, 0.0
            %v464 = vmax.f32 %v456, 0.0
            %v465 = vmax.f32 %v457, 0.0
            %v466 = vmax.f32 %v458, 0.0
            %v467 = vmax.f32 %v459, 0.0
            %v468 = vld [vmem:[%s1] sm:$0xff]
            %v469 = vld [vmem:[%s1 + $0x8] sm:$0xff]
            %v470 = vld [vmem:[%s1 + $0x10] sm:$0xff]
            %v471 = vld [vmem:[%s1 + $0x18] sm:$0xff]
            %v472 = vld [vmem:[%s1 + $0x20] sm:$0xff]
            %v473 = vld [vmem:[%s1 + $0x28] sm:$0xff]
            %v474 = vld [vmem:[%s1 + $0x30] sm:$0xff]
            %v475 = vld [vmem:[%s1 + $0x38] sm:$0xff]
            %v476 = vadd.f32 %v460, 1e-05
            %v477 = vadd.f32 %v461, 1e-05
            %v478 = vadd.f32 %v462, 1e-05
            %v479 = vadd.f32 %v463, 1e-05
            %v480 = vadd.f32 %v464, 1e-05
            %v481 = vadd.f32 %v465, 1e-05
            %v482 = vadd.f32 %v466, 1e-05
            %v483 = vadd.f32 %v467, 1e-05
            %v484 = vrsqrt.pop %v476
            %v485 = vmul.f32 %v484, %v476
            %v486 = vmul.f32 %v485, %v484
            %v487 = vmul.f32 0.5, %v486
            %v488 = vsub.f32 1.5, %v487
            %v489 = vmul.f32 %v484, %v488
            %vm490 = vweird.f32 %v476
            %vm491 = vweird.f32 %v484
            %vm492 = vmor %vm490, %vm491
            %v493 = vsel %vm492, %v484, %v489
            %v494 = vrsqrt.pop %v477
            %v495 = vmul.f32 %v494, %v477
            %v496 = vmul.f32 %v495, %v494
            %v497 = vmul.f32 0.5, %v496
            %v498 = vsub.f32 1.5, %v497
            %v499 = vmul.f32 %v494, %v498
            %vm500 = vweird.f32 %v477
            %vm501 = vweird.f32 %v494
            %vm502 = vmor %vm500, %vm501
            %v503 = vsel %vm502, %v494, %v499
            %v504 = vrsqrt.pop %v478
            %v505 = vmul.f32 %v504, %v478
            %v506 = vmul.f32 %v505, %v504
            %v507 = vmul.f32 0.5, %v506
            %v508 = vsub.f32 1.5, %v507
            %v509 = vmul.f32 %v504, %v508
            %vm510 = vweird.f32 %v478
            %vm511 = vweird.f32 %v504
            %vm512 = vmor %vm510, %vm511
            %v513 = vsel %vm512, %v504, %v509
            %v514 = vrsqrt.pop %v479
            %v515 = vmul.f32 %v514, %v479
            %v516 = vmul.f32 %v515, %v514
            %v517 = vmul.f32 0.5, %v516
            %v518 = vsub.f32 1.5, %v517
            %v519 = vmul.f32 %v514, %v518
            %vm520 = vweird.f32 %v479
            %vm521 = vweird.f32 %v514
            %vm522 = vmor %vm520, %vm521
            %v523 = vsel %vm522, %v514, %v519
            %v524 = vrsqrt.pop %v480
            %v525 = vmul.f32 %v524, %v480
            %v526 = vmul.f32 %v525, %v524
            %v527 = vmul.f32 0.5, %v526
            %v528 = vsub.f32 1.5, %v527
            %v529 = vmul.f32 %v524, %v528
            %vm530 = vweird.f32 %v480
            %vm531 = vweird.f32 %v524
            %vm532 = vmor %vm530, %vm531
            %v533 = vsel %vm532, %v524, %v529
            %v534 = vrsqrt.pop %v481
            %v535 = vmul.f32 %v534, %v481
            %v536 = vmul.f32 %v535, %v534
            %v537 = vmul.f32 0.5, %v536
            %v538 = vsub.f32 1.5, %v537
            %v539 = vmul.f32 %v534, %v538
            %vm540 = vweird.f32 %v481
            %vm541 = vweird.f32 %v534
            %vm542 = vmor %vm540, %vm541
            %v543 = vsel %vm542, %v534, %v539
            %v544 = vrsqrt.pop %v482
            %v545 = vmul.f32 %v544, %v482
            %v546 = vmul.f32 %v545, %v544
            %v547 = vmul.f32 0.5, %v546
            %v548 = vsub.f32 1.5, %v547
            %v549 = vmul.f32 %v544, %v548
            %vm550 = vweird.f32 %v482
            %vm551 = vweird.f32 %v544
            %vm552 = vmor %vm550, %vm551
            %v553 = vsel %vm552, %v544, %v549
            %v554 = vrsqrt.pop %v483
            %v555 = vmul.f32 %v554, %v483
            %v556 = vmul.f32 %v555, %v554
            %v557 = vmul.f32 0.5, %v556
            %v558 = vsub.f32 1.5, %v557
            %v559 = vmul.f32 %v554, %v558
            %vm560 = vweird.f32 %v483
            %vm561 = vweird.f32 %v554
            %vm562 = vmor %vm560, %vm561
            %v563 = vsel %vm562, %v554, %v559
            %v564 = vmul.f32 %v468, %v493
            %v565 = vmul.f32 %v469, %v503
            %v566 = vmul.f32 %v470, %v513
            %v567 = vmul.f32 %v471, %v523
            %v568 = vmul.f32 %v472, %v533
            %v569 = vmul.f32 %v473, %v543
            %v570 = vmul.f32 %v474, %v553
            %v571 = vmul.f32 %v475, %v563
            %572 = vst.msk [vmem:[#allocation2] sm:$0xff] %vm334, %v564
            %573 = vst.msk [vmem:[#allocation2 + $0x8] sm:$0xff] %vm334, %v565
            %574 = vst.msk [vmem:[#allocation2 + $0x10] sm:$0xff] %vm334, %v566
            %575 = vst.msk [vmem:[#allocation2 + $0x18] sm:$0xff] %vm334, %v567
            %576 = vst.msk [vmem:[#allocation2 + $0x20] sm:$0xff] %vm334, %v568
            %577 = vst.msk [vmem:[#allocation2 + $0x28] sm:$0xff] %vm334, %v569
            %578 = vst.msk [vmem:[#allocation2 + $0x30] sm:$0xff] %vm334, %v570
            %579 = vst.msk [vmem:[#allocation2 + $0x38] sm:$0xff] %vm334, %v571
            %v580 = vld [vmem:[%s2] sm:$0xff]
            %v581 = vld [vmem:[%s2 + $0x8] sm:$0xff]
            %v582 = vld [vmem:[%s2 + $0x10] sm:$0xff]
            %v583 = vld [vmem:[%s2 + $0x18] sm:$0xff]
            %v584 = vld [vmem:[%s2 + $0x20] sm:$0xff]
            %v585 = vld [vmem:[%s2 + $0x28] sm:$0xff]
            %v586 = vld [vmem:[%s2 + $0x30] sm:$0xff]
            %v587 = vld [vmem:[%s2 + $0x38] sm:$0xff]
            %v588 = vmul.f32 %v420, %v564
            %v589 = vmul.f32 %v421, %v565
            %v590 = vmul.f32 %v422, %v566
            %v591 = vmul.f32 %v423, %v567
            %v592 = vmul.f32 %v424, %v568
            %v593 = vmul.f32 %v425, %v569
            %v594 = vmul.f32 %v426, %v570
            %v595 = vmul.f32 %v427, %v571
            %v596 = vsub.f32 %v580, %v588
            %v597 = vsub.f32 %v581, %v589
            %v598 = vsub.f32 %v582, %v590
            %v599 = vsub.f32 %v583, %v591
            %v600 = vsub.f32 %v584, %v592
            %v601 = vsub.f32 %v585, %v593
            %v602 = vsub.f32 %v586, %v594
            %v603 = vsub.f32 %v587, %v595
            %604 = vst.msk [vmem:[#allocation3] sm:$0xff] %vm334, %v596
            %605 = vst.msk [vmem:[#allocation3 + $0x8] sm:$0xff] %vm334, %v597
            %606 = vst.msk [vmem:[#allocation3 + $0x10] sm:$0xff] %vm334, %v598
            %607 = vst.msk [vmem:[#allocation3 + $0x18] sm:$0xff] %vm334, %v599
            %608 = vst.msk [vmem:[#allocation3 + $0x20] sm:$0xff] %vm334, %v600
            %609 = vst.msk [vmem:[#allocation3 + $0x28] sm:$0xff] %vm334, %v601
            %610 = vst.msk [vmem:[#allocation3 + $0x30] sm:$0xff] %vm334, %v602
            %611 = vst.msk [vmem:[#allocation3 + $0x38] sm:$0xff] %vm334, %v603
          $region52: #{tpu_custom_call.1} parent=43 // pred_fallthru
            _
        $region44: #{tpu_custom_call.1} parent=35 // pred_fallthru
          _
        %p612 = scmp.eq.s32.totalorder %s26, 1
        // Predicated region
        $region53: #{tpu_custom_call.1} parent=35 // pred_check
          %p613 = pneg %p612
        $region54: #{tpu_custom_call.1} parent=35 // pred_check_branch
          %615 = sbr.rel (%p613) target = $region56
        $region55: #{tpu_custom_call.1} parent=35 // pred_region
          %v616 = vld [vmem:[%s221] sm:$0xff]
          %v617 = vld [vmem:[%s221 + $0x8] sm:$0xff]
          %v618 = vld [vmem:[%s221 + $0x10] sm:$0xff]
          %v619 = vld [vmem:[%s221 + $0x18] sm:$0xff]
          %v620 = vld [vmem:[%s221 + $0x20] sm:$0xff]
          %v621 = vld [vmem:[%s221 + $0x28] sm:$0xff]
          %v622 = vld [vmem:[%s221 + $0x30] sm:$0xff]
          %v623 = vld [vmem:[%s221 + $0x38] sm:$0xff]
          %v624 = vld [vmem:[%s221 + $0x40] sm:$0xff]
          %v625 = vld [vmem:[%s221 + $0x48] sm:$0xff]
          %v626 = vld [vmem:[%s221 + $0x50] sm:$0xff]
          %v627 = vld [vmem:[%s221 + $0x58] sm:$0xff]
          %v628 = vld [vmem:[%s221 + $0x60] sm:$0xff]
          %v629 = vld [vmem:[%s221 + $0x68] sm:$0xff]
          %v630 = vld [vmem:[%s221 + $0x70] sm:$0xff]
          %v631 = vld [vmem:[%s221 + $0x78] sm:$0xff]
          %v632 = vld [vmem:[#allocation2] sm:$0xff]
          %v633 = vld [vmem:[#allocation2 + $0x8] sm:$0xff]
          %v634 = vld [vmem:[#allocation2 + $0x10] sm:$0xff]
          %v635 = vld [vmem:[#allocation2 + $0x18] sm:$0xff]
          %v636 = vld [vmem:[#allocation2 + $0x20] sm:$0xff]
          %v637 = vld [vmem:[#allocation2 + $0x28] sm:$0xff]
          %v638 = vld [vmem:[#allocation2 + $0x30] sm:$0xff]
          %v639 = vld [vmem:[#allocation2 + $0x38] sm:$0xff]
          %641 = vset.pattern.permute.xlu0 0
          %642 = vperm.xlu0 %641, %v632
          %v643 = vpop.permute.xlu0 %642
          %646 = vset.pattern.permute.xlu0 0
          %647 = vperm.xlu0 %646, %v633
          %v648 = vpop.permute.xlu0 %647
          %651 = vset.pattern.permute.xlu0 0
          %652 = vperm.xlu0 %651, %v634
          %v653 = vpop.permute.xlu0 %652
          %656 = vset.pattern.permute.xlu0 0
          %657 = vperm.xlu0 %656, %v635
          %v658 = vpop.permute.xlu0 %657
          %661 = vset.pattern.permute.xlu0 0
          %662 = vperm.xlu0 %661, %v636
          %v663 = vpop.permute.xlu0 %662
          %666 = vset.pattern.permute.xlu0 0
          %667 = vperm.xlu0 %666, %v637
          %v668 = vpop.permute.xlu0 %667
          %671 = vset.pattern.permute.xlu0 0
          %672 = vperm.xlu0 %671, %v638
          %v673 = vpop.permute.xlu0 %672
          %676 = vset.pattern.permute.xlu0 0
          %677 = vperm.xlu0 %676, %v639
          %v678 = vpop.permute.xlu0 %677
          %v680 = vmul.f32 %v616, %v643
          %v681 = vmul.f32 %v617, %v643
          %v682 = vmul.f32 %v618, %v648
          %v683 = vmul.f32 %v619, %v648
          %v684 = vmul.f32 %v620, %v653
          %v685 = vmul.f32 %v621, %v653
          %v686 = vmul.f32 %v622, %v658
          %v687 = vmul.f32 %v623, %v658
          %v688 = vmul.f32 %v624, %v663
          %v689 = vmul.f32 %v625, %v663
          %v690 = vmul.f32 %v626, %v668
          %v691 = vmul.f32 %v627, %v668
          %v692 = vmul.f32 %v628, %v673
          %v693 = vmul.f32 %v629, %v673
          %v694 = vmul.f32 %v630, %v678
          %v695 = vmul.f32 %v631, %v678
          %v696 = vld [vmem:[#allocation3] sm:$0xff]
          %v697 = vld [vmem:[#allocation3 + $0x8] sm:$0xff]
          %v698 = vld [vmem:[#allocation3 + $0x10] sm:$0xff]
          %v699 = vld [vmem:[#allocation3 + $0x18] sm:$0xff]
          %v700 = vld [vmem:[#allocation3 + $0x20] sm:$0xff]
          %v701 = vld [vmem:[#allocation3 + $0x28] sm:$0xff]
          %v702 = vld [vmem:[#allocation3 + $0x30] sm:$0xff]
          %v703 = vld [vmem:[#allocation3 + $0x38] sm:$0xff]
          %705 = vset.pattern.permute.xlu0 0
          %706 = vperm.xlu0 %705, %v696
          %v707 = vpop.permute.xlu0 %706
          %710 = vset.pattern.permute.xlu0 0
          %711 = vperm.xlu0 %710, %v697
          %v712 = vpop.permute.xlu0 %711
          %715 = vset.pattern.permute.xlu0 0
          %716 = vperm.xlu0 %715, %v698
          %v717 = vpop.permute.xlu0 %716
          %720 = vset.pattern.permute.xlu0 0
          %721 = vperm.xlu0 %720, %v699
          %v722 = vpop.permute.xlu0 %721
          %725 = vset.pattern.permute.xlu0 0
          %726 = vperm.xlu0 %725, %v700
          %v727 = vpop.permute.xlu0 %726
          %730 = vset.pattern.permute.xlu0 0
          %731 = vperm.xlu0 %730, %v701
          %v732 = vpop.permute.xlu0 %731
          %735 = vset.pattern.permute.xlu0 0
          %736 = vperm.xlu0 %735, %v702
          %v737 = vpop.permute.xlu0 %736
          %740 = vset.pattern.permute.xlu0 0
          %741 = vperm.xlu0 %740, %v703
          %v742 = vpop.permute.xlu0 %741
          %v744 = vadd.f32 %v680, %v707
          %v745 = vadd.f32 %v681, %v707
          %v746 = vadd.f32 %v682, %v712
          %v747 = vadd.f32 %v683, %v712
          %v748 = vadd.f32 %v684, %v717
          %v749 = vadd.f32 %v685, %v717
          %v750 = vadd.f32 %v686, %v722
          %v751 = vadd.f32 %v687, %v722
          %v752 = vadd.f32 %v688, %v727
          %v753 = vadd.f32 %v689, %v727
          %v754 = vadd.f32 %v690, %v732
          %v755 = vadd.f32 %v691, %v732
          %v756 = vadd.f32 %v692, %v737
          %v757 = vadd.f32 %v693, %v737
          %v758 = vadd.f32 %v694, %v742
          %v759 = vadd.f32 %v695, %v742
          %v760 = vmax.f32 %v744, 0.0
          %v761 = vmax.f32 %v745, 0.0
          %v762 = vmax.f32 %v746, 0.0
          %v763 = vmax.f32 %v747, 0.0
          %v764 = vmax.f32 %v748, 0.0
          %v765 = vmax.f32 %v749, 0.0
          %v766 = vmax.f32 %v750, 0.0
          %v767 = vmax.f32 %v751, 0.0
          %v768 = vmax.f32 %v752, 0.0
          %v769 = vmax.f32 %v753, 0.0
          %v770 = vmax.f32 %v754, 0.0
          %v771 = vmax.f32 %v755, 0.0
          %v772 = vmax.f32 %v756, 0.0
          %v773 = vmax.f32 %v757, 0.0
          %v774 = vmax.f32 %v758, 0.0
          %v775 = vmax.f32 %v759, 0.0
          %v776 = vld [vmem:[%s3] sm:$0xf]
          %vm777 = vcmask 523264
          %v779 = vsel %vm777, %v776, 0
          %781 = vmatpush.msra.mxu0 0.0
          %782 = vmatpush.msra.mxu0 0.0
          %783 = vmatpush.msra.mxu0 0.0
          %784 = vmatpush.msra.mxu0 0.0
          %785 = vmatpush.msra.mxu0 0.0
          %786 = vmatpush.msra.mxu0 0.0
          %787 = vmatpush.msra.mxu0 0.0
          %788 = vmatpush.msra.mxu0 0.0
          %789 = vmatpush.msra.mxu0 %v774
          %790 = vmatpush.msra.mxu0 %v772
          %791 = vmatpush.msra.mxu0 %v770
          %792 = vmatpush.msra.mxu0 %v768
          %793 = vmatpush.msra.mxu0 %v766
          %794 = vmatpush.msra.mxu0 %v764
          %795 = vmatpush.msra.mxu0 %v762
          %796 = vmatpush.msra.mxu0 %v760
          %797 = vmatmul.f32.gmra.mxu0 %v779
          %v798 = vpop.f32.mrf.mxu0
          %v799 = vadd.f32 0.0, %v798
          %800 = vdwg.mxu0
          %801 = vmatpush.msra.mxu0 0.0
          %802 = vmatpush.msra.mxu0 0.0
          %803 = vmatpush.msra.mxu0 0.0
          %804 = vmatpush.msra.mxu0 0.0
          %805 = vmatpush.msra.mxu0 0.0
          %806 = vmatpush.msra.mxu0 0.0
          %807 = vmatpush.msra.mxu0 0.0
          %808 = vmatpush.msra.mxu0 0.0
          %809 = vmatpush.msra.mxu0 %v775
          %810 = vmatpush.msra.mxu0 %v773
          %811 = vmatpush.msra.mxu0 %v771
          %812 = vmatpush.msra.mxu0 %v769
          %813 = vmatpush.msra.mxu0 %v767
          %814 = vmatpush.msra.mxu0 %v765
          %815 = vmatpush.msra.mxu0 %v763
          %816 = vmatpush.msra.mxu0 %v761
          %817 = vmatmul.f32.gmra.mxu0 %v779
          %v818 = vpop.f32.mrf.mxu0
          %v819 = vadd.f32 0.0, %v818
          %820 = vdwg.mxu0
          %v823 = vrot.slane %v819, 4
          %vm824 = vcmask 1043456
          %v825 = vsel %vm824, %v799, %v823
          %827 = vst [vmem:[%s246] sm:$0xff] %v825
        $region56: #{tpu_custom_call.1} parent=35 // pred_fallthru
          _
        %s828 = sand.u32 %s145, 1
        %s829 = scalar_lea.sflag [#allocation6], %s828
        %s830 = sand.u32 %s145, 1
        %s831 = smul.addr %s830, 8
        %s832 = scalar_lea.vmem [#allocation7], %s831
        // Predicated region
        $region57: #{tpu_custom_call.1} parent=35 // pred_check
          %p833 = pneg %p155
        $region58: #{tpu_custom_call.1} parent=35 // pred_check_branch
          %835 = sbr.rel (%p833) target = $region60
        $region59: #{tpu_custom_call.1} parent=35 // pred_region
          %s836 = smul.u32 %s27, %s26
          %s837 = smul.u32 %s28, %s26
          %s838 = smul.u32 2, %s837
          %840 = vsyncadd %s829, 0
          %s841 = smul.addr %s836, 2
          %s842 = sadd.s32 %s838, %s841
          %s843 = smul.addr %s842, 4
          %s844 = scalar_lea.hbm %s4, %s843
          %s846 = sshll.u32 %s832, 4
          %s847 = int_to_ptr.vmem [resolvable:$true] %s846
          %s848 = sshll.u32 %s844, 4
          %s849 = int_to_ptr.hbm [resolvable:$true] %s848
          %851 = dma.vmem_to_hbm [thread:$0]  %s847, 128, %s849, %s829
        $region60: #{tpu_custom_call.1} parent=35 // pred_fallthru
          _
      $region36: #{tpu_custom_call.1} parent=5 // pred_fallthru
        _
      %p852 = scmp.le.s32.totalorder 2, %s16
      // Predicated region
      $region61: #{tpu_custom_call.1} parent=5 // pred_check
        %p853 = pneg %p852
      $region62: #{tpu_custom_call.1} parent=5 // pred_check_branch
        %855 = sbr.rel (%p853) target = $region64
      $region63: #{tpu_custom_call.1} parent=5 // pred_region
        %s856 = ssub.s32 %s16, 2
        // Predicated region
        $region65: #{tpu_custom_call.1} parent=63 // pred_check
          %p857 = pneg %p161
        $region66: #{tpu_custom_call.1} parent=63 // pred_check_branch
          %859 = sbr.rel (%p857) target = $region68
        $region67: #{tpu_custom_call.1} parent=63 // pred_region
          %s860 = sand.u32 %s146, 1
          %s861 = scalar_lea.sflag [#allocation6], %s860
          %s862 = sand.u32 %s146, 1
          %s863 = smul.addr %s862, 8
          %s864 = scalar_lea.vmem [#allocation7], %s863
          %866 = dma.done %s861, 128
        $region68: #{tpu_custom_call.1} parent=63 // pred_fallthru
          _
      $region64: #{tpu_custom_call.1} parent=5 // pred_fallthru
        _
    $region6: #{tpu_custom_call.1} parent=1 // loop_footer
      %s20 = sadd.s32 1, %s16
    $region7: #{tpu_custom_call.1} parent=1 // loop_footer_branch
      %15 = sbr.rel target = $region3
    $region8: #{tpu_custom_call.1} parent=1 // loop_exit
      _
    %867 = vsyncpa [#allocation5], 1
    %s868 = scalar_lea.sflag [#allocation5], 1
    %869 = vsyncpa %s868, 1
    %870 = vsyncpa [#allocation6], 1
    %s871 = scalar_lea.sflag [#allocation6], 1
    %872 = vsyncpa %s871, 1

</llo_original>
